<compile_context>
chip_gen: v6e
topology: v6e:2x2x1
jax: 0.10.0
libtpu: 0.0.40
codegen_flags: <defaults>
</compile_context>

<pallas_src>
import jax
import jax.numpy as jnp
from jax.experimental import pallas as pl
from jax.experimental.pallas import tpu as pltpu


# ------------------------------------------------------------------ kernels --
def _sglu_kernel_resident(x_ref, wu_ref, wv_ref, wo_ref, o_ref):
    """nh == 1: full hidden dim per step; weights VMEM-resident; no accumulator."""
    x = x_ref[...]
    u = jnp.dot(x, wu_ref[...], preferred_element_type=jnp.float32)
    v = jnp.dot(x, wv_ref[...], preferred_element_type=jnp.float32)
    g = (v * u).astype(x.dtype)
    o_ref[...] = jnp.dot(
        g, wo_ref[...], preferred_element_type=jnp.float32
    ).astype(o_ref.dtype)


def _sglu_kernel_acc(x_ref, wu_ref, wv_ref, wo_ref, o_ref, acc_ref):
    """nh > 1: hidden dim tiled on the last ("arbitrary") grid axis; f32 acc."""
    h = pl.program_id(1)
    last = pl.num_programs(1) - 1

    x = x_ref[...]
    u = jnp.dot(x, wu_ref[...], preferred_element_type=jnp.float32)
    v = jnp.dot(x, wv_ref[...], preferred_element_type=jnp.float32)
    g = (v * u).astype(x.dtype)
    partial = jnp.dot(g, wo_ref[...], preferred_element_type=jnp.float32)

    @pl.when(h == 0)
    def _():
        acc_ref[...] = partial  # first block: write directly (no zero-init pass)

    @pl.when(jnp.logical_and(h > 0, h < last))
    def _():
        acc_ref[...] = acc_ref[...] + partial

    @pl.when(jnp.logical_and(h > 0, h == last))
    def _():
        # Fused final step: add the last partial and write straight to the
        # output (saves one tm x D_in f32 store + reload per M tile).
        o_ref[...] = (acc_ref[...] + partial).astype(o_ref.dtype)


# ------------------------------------------------------------- tile choice ---
_TM_CANDS = (2048, 1024, 768, 512, 384, 256, 192, 128, 96, 64, 48, 32, 24, 16, 8)
_TH_CANDS = (1024, 512, 256, 128)


def _vmem_capacity_bytes():
    try:
        return int(pltpu.get_tpu_info().vmem_capacity_bytes)
    except Exception:
        return 64 << 20  # conservative (v7x per-TC size); safe on all generations


def _footprint_bytes(tm, th, d, nh, x_bytes, w_bytes, o_bytes):
    """Rough VMEM footprint: double-buffered tiles + accumulator + temporaries."""
    f = 2 * tm * d * x_bytes              # x tile (double-buffered)
    f += 2 * tm * d * o_bytes             # out tile (double-buffered)
    f += 2 * 2 * d * th * w_bytes         # W_U + W_V blocks (double-buffered)
    f += 2 * th * d * w_bytes             # W_O block (double-buffered)
    if nh > 1:
        f += tm * d * 4                   # f32 accumulator scratch
    f += tm * th * (4 + 4 + x_bytes)      # u, v (f32) and g temporaries
    f += tm * d * 4                       # partial-product temporary
    return f


def _choose_tiles(m, h, d, x_bytes, w_bytes, o_bytes, budget,
                  tm_fixed=None, th_fixed=None):
    if tm_fixed is not None:
        tm_cands = [min(tm_fixed, m)]
    else:
        tm_cands = [c for c in _TM_CANDS if c <= m and m % c == 0] or [m]
    if th_fixed is not None:
        th_cands = [min(th_fixed, h)]
    else:
        # Full hidden size first (nh == 1 -> weights resident), then the
        # largest lane-aligned divisors.
        th_cands = [h] + [c for c in _TH_CANDS if c < h and h % c == 0]

    def max_fitting_tm(th):
        nh = h // th
        for tm in tm_cands:
            if _footprint_bytes(tm, th, d, nh, x_bytes, w_bytes, o_bytes) <= budget:
                return tm
        return None

    best = None
    for th in th_cands:  # largest th first
        tm = max_fitting_tm(th)
        if tm is None:
            continue
        if tm >= min(256, tm_cands[0]):
            best = (tm, th)
            break
        if best is None or tm > best[0]:
            best = (tm, th)
    if best is None:  # nothing fits the estimate; go minimal and rely on limit
        best = (tm_cands[-1], th_cands[-1])
    tm, th = best

    # Keep >= 2 M tiles (pipelining + v7x megacore sharding) when M allows.
    if tm_fixed is None and m // tm < 2 and m >= 16:
        for c in tm_cands:
            if c <= m // 2:
                tm = c
                break
    return tm, th


# ----------------------------------------------------------------- wrapper ---
def sglu(x, w_u, w_v, w_o, *, tm=None, th=None, compute_dtype=None,
         vmem_limit_bytes=None):
    """x: (..., input_size) -> (..., input_size). Matches PyTorch SGLU.forward."""
    input_size, hidden_size = w_u.shape
    assert w_v.shape == (input_size, hidden_size)
    assert w_o.shape == (hidden_size, input_size)
    assert x.shape[-1] == input_size

    lead_shape = x.shape[:-1]
    out_dtype = x.dtype
    x2 = x.reshape(-1, input_size)
    M = x2.shape[0]

    # Optional bf16 compute path (v6e/v7x MXU peak; user opt-in, slightly lossy).
    if compute_dtype is not None:
        x2 = x2.astype(compute_dtype)
        w_u = w_u.astype(compute_dtype)
        w_v = w_v.astype(compute_dtype)
        w_o = w_o.astype(compute_dtype)

    x_bytes = x2.dtype.itemsize
    w_bytes = w_u.dtype.itemsize
    o_bytes = jnp.dtype(out_dtype).itemsize

    capacity = _vmem_capacity_bytes()
    budget = int(0.80 * capacity)  # ~102 MiB on v5e/v6e, ~51 MiB on v7x

    tm, th = _choose_tiles(M, hidden_size, input_size, x_bytes, w_bytes, o_bytes,
                           budget, tm_fixed=tm, th_fixed=th)

    assert M % tm == 0, "M (prod of leading dims) must be divisible by tm"
    assert tm == M or tm % 8 == 0, "tm must be a multiple of 8 or the full M"
    assert hidden_size % th == 0, "hidden_size must be divisible by th"
    nh = hidden_size // th
    assert nh == 1 or th % 128 == 0, "tiled th must be a multiple of 128"

    footprint = _footprint_bytes(tm, th, input_size, nh, x_bytes, w_bytes, o_bytes)
    if vmem_limit_bytes is None:
        vmem_limit_bytes = int(min(int(0.90 * capacity),
                                   max(budget, int(1.5 * footprint) + (4 << 20))))

    num_m_tiles = M // tm
    weight_bytes = (w_u.size + w_v.size + w_o.size) * w_bytes
    cost = pl.CostEstimate(
        flops=int(3 * 2 * M * input_size * hidden_size),
        transcendentals=0,
        bytes_accessed=int(
            x2.size * x_bytes
            + M * input_size * o_bytes
            # Weights are re-streamed once per M tile when the hidden axis is
            # tiled; streamed exactly once (VMEM-resident) when nh == 1.
            + weight_bytes * (num_m_tiles if nh > 1 else 1)
        ),
    )

    if nh == 1:
        kernel = _sglu_kernel_resident
        grid_spec = pltpu.PrefetchScalarGridSpec(
            num_scalar_prefetch=0,
            grid=(num_m_tiles,),
            in_specs=[
                pl.BlockSpec((tm, input_size), lambda i: (i, 0)),
                pl.BlockSpec((input_size, hidden_size), lambda i: (0, 0)),
                pl.BlockSpec((input_size, hidden_size), lambda i: (0, 0)),
                pl.BlockSpec((hidden_size, input_size), lambda i: (0, 0)),
            ],
            out_specs=pl.BlockSpec((tm, input_size), lambda i: (i, 0)),
        )
        dims = ("parallel",)
    else:
        kernel = _sglu_kernel_acc
        grid_spec = pltpu.PrefetchScalarGridSpec(
            num_scalar_prefetch=0,
            grid=(num_m_tiles, nh),  # reduction axis last, "arbitrary"
            in_specs=[
                pl.BlockSpec((tm, input_size), lambda i, h: (i, 0)),
                pl.BlockSpec((input_size, th), lambda i, h: (0, h)),
                pl.BlockSpec((input_size, th), lambda i, h: (0, h)),
                pl.BlockSpec((th, input_size), lambda i, h: (h, 0)),
            ],
            out_specs=pl.BlockSpec((tm, input_size), lambda i, h: (i, 0)),
            scratch_shapes=[pltpu.VMEM((tm, input_size), jnp.float32)],
        )
        dims = ("parallel", "arbitrary")

    out = pl.pallas_call(
        kernel,
        out_shape=jax.ShapeDtypeStruct((M, input_size), out_dtype),
        grid_spec=grid_spec,
        compiler_params=pltpu.CompilerParams(
            dimension_semantics=dims,
            vmem_limit_bytes=vmem_limit_bytes,
        ),
        cost_estimate=cost,
    )(x2, w_u, w_v, w_o)
    return out.reshape(*lead_shape, input_size)


# --------------------------------------------------------------- reference ---
def sglu_ref(x, w_u, w_v, w_o):
    hi = jax.lax.Precision.HIGHEST
    xf = x.astype(jnp.float32)
    u = jnp.dot(xf, w_u.astype(jnp.float32), precision=hi)
    v = jnp.dot(xf, w_v.astype(jnp.float32), precision=hi)
    return jnp.dot(v * u, w_o.astype(jnp.float32), precision=hi)


def _check(out, ref, tol):
    err = jnp.max(jnp.abs(out.astype(jnp.float32) - ref)) / (
        jnp.max(jnp.abs(ref)) + 1e-12)
    assert float(err) < tol, f"relative error {float(err)} too large"


if __name__ == "__main__":
    key = jax.random.PRNGKey(0)

    # --- Test 1: module-scale small shapes (nh=1, weights VMEM-resident) -----
    batch, seq = 2, 8
    input_size, hidden_size = 16, 32
    k1, k2, k3, k4, k5 = jax.random.split(key, 5)
    w_u = jax.random.normal(k1, (input_size, hidden_size), jnp.float32) / hidden_size
    w_v = jax.random.normal(k2, (input_size, hidden_size), jnp.float32) / hidden_size
    w_o = jax.random.normal(k3, (hidden_size, input_size), jnp.float32) / hidden_size
    x = jax.random.normal(k4, (batch, seq, input_size), jnp.float32)

    out = jax.block_until_ready(sglu(x, w_u, w_v, w_o))
    assert out.shape == (batch, seq, input_size)
    _check(out, sglu_ref(x, w_u, w_v, w_o), tol=2e-2)

    # --- Test 2: tiled hidden axis (nh=2 -> accumulating kernel, M grid >= 2) -
    b2, s2, d2, h2 = 4, 128, 128, 256
    k6, k7, k8, k9 = jax.random.split(k5, 4)
    w_u2 = jax.random.normal(k6, (d2, h2), jnp.float32) / h2
    w_v2 = jax.random.normal(k7, (d2, h2), jnp.float32) / h2
    w_o2 = jax.random.normal(k8, (h2, d2), jnp.float32) / h2
    x2 = jax.random.normal(k9, (b2, s2, d2), jnp.float32)

    out2 = jax.block_until_ready(sglu(x2, w_u2, w_v2, w_o2, th=128))
    assert out2.shape == (b2, s2, d2)
    _check(out2, sglu_ref(x2, w_u2, w_v2, w_o2), tol=2e-2)

    # --- Test 3: bf16 dtype flow (v6e/v7x MXU path), checked vs f32 ref -------
    out3 = jax.block_until_ready(
        sglu(x2.astype(jnp.bfloat16),
             w_u2.astype(jnp.bfloat16),
             w_v2.astype(jnp.bfloat16),
             w_o2.astype(jnp.bfloat16)))
    assert out3.shape == (b2, s2, d2)
    _check(out3, sglu_ref(x2.astype(jnp.bfloat16), w_u2.astype(jnp.bfloat16),
                          w_v2.astype(jnp.bfloat16), w_o2.astype(jnp.bfloat16)),
           tol=6e-2)

    print("KERNEL_OK")
</pallas_src>

<mosaic_0001>
module attributes {stable_mosaic.version = 11 : i64} {
  func.func @_sglu_kernel_resident(%arg0: i32, %arg1: memref<8x16xf32, #tpu.memory_space<vmem>>, %arg2: memref<16x32xf32, #tpu.memory_space<vmem>>, %arg3: memref<16x32xf32, #tpu.memory_space<vmem>>, %arg4: memref<32x16xf32, #tpu.memory_space<vmem>>, %arg5: memref<8x16xf32, #tpu.memory_space<vmem>>) attributes {dimension_semantics = [#tpu.dimension_semantics<parallel>], iteration_bounds = array<i64: 2>, scalar_prefetch = 0 : i64, scratch_operands = 0 : i64, tpu.core_type = #tpu.core_type<tc>, window_params = [{transform_indices = @transform_0, window_bounds = array<i64: 8, 16>}, {pipeline_mode = #tpu.pipeline_mode<synchronous>, transform_indices = @transform_1, window_bounds = array<i64: 16, 32>}, {pipeline_mode = #tpu.pipeline_mode<synchronous>, transform_indices = @transform_2, window_bounds = array<i64: 16, 32>}, {pipeline_mode = #tpu.pipeline_mode<synchronous>, transform_indices = @transform_3, window_bounds = array<i64: 32, 16>}, {transform_indices = @transform_4, window_bounds = array<i64: 8, 16>}]} {
    %c0 = arith.constant 0 : index
    %c0_0 = arith.constant 0 : index
    %0 = vector.load %arg1[%c0, %c0_0] : memref<8x16xf32, #tpu.memory_space<vmem>>, vector<8x16xf32>
    %c0_1 = arith.constant 0 : index
    %c0_2 = arith.constant 0 : index
    %1 = vector.load %arg2[%c0_1, %c0_2] : memref<16x32xf32, #tpu.memory_space<vmem>>, vector<16x32xf32>
    %cst = arith.constant dense<0.000000e+00> : vector<8x32xf32>
    %2 = tpu.matmul %0, %1, %cst {dimension_numbers = #tpu.dot_dimension_numbers<[1], [0], [0], [1], [0, 0, 1, 1], [], []>} : vector<8x16xf32>, vector<16x32xf32>, vector<8x32xf32> -> vector<8x32xf32>
    %c0_3 = arith.constant 0 : index
    %c0_4 = arith.constant 0 : index
    %3 = vector.load %arg3[%c0_3, %c0_4] : memref<16x32xf32, #tpu.memory_space<vmem>>, vector<16x32xf32>
    %cst_5 = arith.constant dense<0.000000e+00> : vector<8x32xf32>
    %4 = tpu.matmul %0, %3, %cst_5 {dimension_numbers = #tpu.dot_dimension_numbers<[1], [0], [0], [1], [0, 0, 1, 1], [], []>} : vector<8x16xf32>, vector<16x32xf32>, vector<8x32xf32> -> vector<8x32xf32>
    %5 = arith.mulf %4, %2 : vector<8x32xf32>
    %c0_6 = arith.constant 0 : index
    %c0_7 = arith.constant 0 : index
    %6 = vector.load %arg4[%c0_6, %c0_7] : memref<32x16xf32, #tpu.memory_space<vmem>>, vector<32x16xf32>
    %cst_8 = arith.constant dense<0.000000e+00> : vector<8x16xf32>
    %7 = tpu.matmul %5, %6, %cst_8 {dimension_numbers = #tpu.dot_dimension_numbers<[1], [0], [0], [1], [0, 0, 1, 1], [], []>} : vector<8x32xf32>, vector<32x16xf32>, vector<8x16xf32> -> vector<8x16xf32>
    %c0_9 = arith.constant 0 : index
    %c0_10 = arith.constant 0 : index
    %8 = vector.load %arg5[%c0_9, %c0_10] : memref<8x16xf32, #tpu.memory_space<vmem>>, vector<8x16xf32>
    tpu.vector_store %arg5[%c0_9, %c0_10], %7 {strides = array<i32>} : memref<8x16xf32, #tpu.memory_space<vmem>>, vector<8x16xf32>,
    return
  }
  func.func @transform_0(%arg0: i32) -> (i32, i32) {
    %c0_i32 = arith.constant 0 : i32
    %c0_i32_0 = arith.constant 0 : i32
    return %arg0, %c0_i32 : i32, i32
  }
  func.func @transform_1(%arg0: i32) -> (i32, i32) {
    %c0_i32 = arith.constant 0 : i32
    %c0_i32_0 = arith.constant 0 : i32
    %c0_i32_1 = arith.constant 0 : i32
    return %c0_i32, %c0_i32_0 : i32, i32
  }
  func.func @transform_2(%arg0: i32) -> (i32, i32) {
    %c0_i32 = arith.constant 0 : i32
    %c0_i32_0 = arith.constant 0 : i32
    %c0_i32_1 = arith.constant 0 : i32
    return %c0_i32, %c0_i32_0 : i32, i32
  }
  func.func @transform_3(%arg0: i32) -> (i32, i32) {
    %c0_i32 = arith.constant 0 : i32
    %c0_i32_0 = arith.constant 0 : i32
    %c0_i32_1 = arith.constant 0 : i32
    return %c0_i32, %c0_i32_0 : i32, i32
  }
  func.func @transform_4(%arg0: i32) -> (i32, i32) {
    %c0_i32 = arith.constant 0 : i32
    %c0_i32_0 = arith.constant 0 : i32
    return %arg0, %c0_i32 : i32, i32
  }
}

</mosaic_0001>

<llo_original>
// kernel: tpu_custom_call.1
$region0: #{tpu_custom_call.1}
  #allocation0 [shape = 'u32[]', space=smem, size = 0x4, offset = 0x4, fixed_abs, tag = 'smem constant byte address 0x4 - core index']
  #allocation1 [shape = 'u32[144,128]{1,0:T(1,128)}', space=vmem, size = 0x12000, scoped, tag = 'internal scratch']
  %s0 = inlined_call_operand.vmem [shape: f32[16,16], index: 0, kind: input, shape index: {}]
  %s1 = inlined_call_operand.vmem [shape: f32[16,32], index: 1, kind: input, shape index: {}]
  %s2 = inlined_call_operand.vmem [shape: f32[16,32], index: 2, kind: input, shape index: {}]
  %s3 = inlined_call_operand.vmem [shape: f32[32,16], index: 3, kind: input, shape index: {}]
  %s4 = inlined_call_operand.hbm [shape: f32[16,16], index: 4, kind: output, shape index: {}]
  %s5 = sld [smem:[#allocation0]]
  $region49: #{tpu_custom_call.1} parent=0
    _
  %s7 = ssub.s32 1, %s5
  %s8 = scalar_select 0, %s7, %s5
  $region1: #{tpu_custom_call.1} parent=0
    #allocation2 [shape = 'u8[8192]{0}', space=vmem, size = 0x2000, scoped, tag = 'output window, operand 0']
    #allocation3 [shape = 's32[2]{0}', space=sflag, size = 0x8, scoped, tag = 'scoped memory for tpu_custom_call.1']
    %9 = vsyncpa [#allocation3], 0
    %s10 = scalar_lea.sflag [#allocation3], 1
    %11 = vsyncpa %s10, 0
    loop: start=0, step=1, limit=4
    $region2: #{tpu_custom_call.1} parent=1 // loop_pre_header
      _
    $region3: #{tpu_custom_call.1} parent=1 // loop_header
      %s13 = sphi 0, %s17
      %p14 = scmp.ge.s32.totalorder %s13, 4
      %s23 = sphi 0, %s25
      %s26 = sphi 0, %s23
      %s27 = sphi 0, %s26
      %s43 = sphi 0, %s27
      %s47 = sphi 0, %s47
      %s49 = sphi 0, %s47
      %s50 = sphi 0, %s49
      %s64 = sphi 0, %s50
      %s68 = sphi 0, %s68
      %s70 = sphi 0, %s68
      %s71 = sphi 0, %s70
      %s85 = sphi 0, %s71
      %s89 = sphi 0, %s89
      %s91 = sphi 0, %s89
      %s92 = sphi 0, %s91
      %s106 = sphi 0, %s92
      %s112 = sphi 0, %s114
      %s115 = sphi 0, %s112
      %s116 = sphi 0, %s115
      %s132 = sphi 0, %s116
    $region4: #{tpu_custom_call.1} parent=1 // loop_header_branch
      %16 = sbr.rel (%p14) target = $region8
    $region5: #{tpu_custom_call.1} parent=1 // loop_body
      %s18 = ssub.s32 %s13, 1
      %s19 = ssub.s32 %s13, 2
      %s20 = sadd.s32 %s13, 1
      %s21 = ssub.s32 %s13, %s20
      %p22 = scmp.eq.s32.totalorder %s21, 0
      %s24 = sadd.s32 %s23, 1
      %s25 = scalar_select %p22, %s23, %s24
      %p28 = pneg %p22
      %p29 = scmp.eq.s32.totalorder %s13, 1
      %p30 = por %p28, %p29
      %p31 = scmp.ne.s32.totalorder %s23, %s26
      %p32 = scmp.eq.s32.totalorder %s13, 0
      %p33 = por %p31, %p32
      %p34 = scmp.ne.s32.totalorder %s23, %s26
      %p35 = scmp.eq.s32.totalorder %s18, 1
      %p36 = por %p34, %p35
      %p37 = scmp.ne.s32.totalorder %s26, %s27
      %p38 = scmp.eq.s32.totalorder %s18, 0
      %p39 = por %p37, %p38
      %p40 = scmp.ne.s32.totalorder %s26, %s27
      %p41 = scmp.eq.s32.totalorder %s19, 1
      %p42 = por %p40, %p41
      %p44 = scmp.ne.s32.totalorder %s27, %s43
      %p45 = scmp.eq.s32.totalorder %s19, 0
      %p46 = por %p44, %p45
      %s48 = sadd.s32 %s47, 1
      %p51 = scmp.eq.s32.totalorder %s13, 1
      %p52 = scmp.ne.s32.totalorder %s47, %s49
      %p53 = scmp.eq.s32.totalorder %s13, 0
      %p54 = por %p52, %p53
      %p55 = scmp.ne.s32.totalorder %s47, %s49
      %p56 = scmp.eq.s32.totalorder %s18, 1
      %p57 = por %p55, %p56
      %p58 = scmp.ne.s32.totalorder %s49, %s50
      %p59 = scmp.eq.s32.totalorder %s18, 0
      %p60 = por %p58, %p59
      %p61 = scmp.ne.s32.totalorder %s49, %s50
      %p62 = scmp.eq.s32.totalorder %s19, 1
      %p63 = por %p61, %p62
      %p65 = scmp.ne.s32.totalorder %s50, %s64
      %p66 = scmp.eq.s32.totalorder %s19, 0
      %p67 = por %p65, %p66
      %s69 = sadd.s32 %s68, 1
      %p72 = scmp.eq.s32.totalorder %s13, 1
      %p73 = scmp.ne.s32.totalorder %s68, %s70
      %p74 = scmp.eq.s32.totalorder %s13, 0
      %p75 = por %p73, %p74
      %p76 = scmp.ne.s32.totalorder %s68, %s70
      %p77 = scmp.eq.s32.totalorder %s18, 1
      %p78 = por %p76, %p77
      %p79 = scmp.ne.s32.totalorder %s70, %s71
      %p80 = scmp.eq.s32.totalorder %s18, 0
      %p81 = por %p79, %p80
      %p82 = scmp.ne.s32.totalorder %s70, %s71
      %p83 = scmp.eq.s32.totalorder %s19, 1
      %p84 = por %p82, %p83
      %p86 = scmp.ne.s32.totalorder %s71, %s85
      %p87 = scmp.eq.s32.totalorder %s19, 0
      %p88 = por %p86, %p87
      %s90 = sadd.s32 %s89, 1
      %p93 = scmp.eq.s32.totalorder %s13, 1
      %p94 = scmp.ne.s32.totalorder %s89, %s91
      %p95 = scmp.eq.s32.totalorder %s13, 0
      %p96 = por %p94, %p95
      %p97 = scmp.ne.s32.totalorder %s89, %s91
      %p98 = scmp.eq.s32.totalorder %s18, 1
      %p99 = por %p97, %p98
      %p100 = scmp.ne.s32.totalorder %s91, %s92
      %p101 = scmp.eq.s32.totalorder %s18, 0
      %p102 = por %p100, %p101
      %p103 = scmp.ne.s32.totalorder %s91, %s92
      %p104 = scmp.eq.s32.totalorder %s19, 1
      %p105 = por %p103, %p104
      %p107 = scmp.ne.s32.totalorder %s92, %s106
      %p108 = scmp.eq.s32.totalorder %s19, 0
      %p109 = por %p107, %p108
      %s110 = ssub.s32 %s13, %s20
      %p111 = scmp.eq.s32.totalorder %s110, 0
      %s113 = sadd.s32 %s112, 1
      %s114 = scalar_select %p111, %s112, %s113
      %p117 = pneg %p111
      %p118 = scmp.eq.s32.totalorder %s13, 1
      %p119 = por %p117, %p118
      %p120 = scmp.ne.s32.totalorder %s112, %s115
      %p121 = scmp.eq.s32.totalorder %s13, 0
      %p122 = por %p120, %p121
      %p123 = scmp.ne.s32.totalorder %s112, %s115
      %p124 = scmp.eq.s32.totalorder %s18, 1
      %p125 = por %p123, %p124
      %p126 = scmp.ne.s32.totalorder %s115, %s116
      %p127 = scmp.eq.s32.totalorder %s18, 0
      %p128 = por %p126, %p127
      %p129 = scmp.ne.s32.totalorder %s115, %s116
      %p130 = scmp.eq.s32.totalorder %s19, 1
      %p131 = por %p129, %p130
      %p133 = scmp.ne.s32.totalorder %s116, %s132
      %p134 = scmp.eq.s32.totalorder %s19, 0
      %p135 = por %p133, %p134
      %p136 = scmp.le.s32.totalorder 1, %s13
      %p137 = scmp.lt.s32.totalorder %s13, 3
      %p138 = pnand %p136, %p137
      %p139 = pneg %p138
      // Predicated region
      $region9: #{tpu_custom_call.1} parent=5 // pred_check
        _
      $region10: #{tpu_custom_call.1} parent=5 // pred_check_branch
        %141 = sbr.rel (%p138) target = $region12
      $region11: #{tpu_custom_call.1} parent=5 // pred_region
        %s142 = ssub.s32 %s13, 1
        // Predicated region
        $region13: #{tpu_custom_call.1} parent=11 // pred_check
          %p143 = pneg %p60
        $region14: #{tpu_custom_call.1} parent=11 // pred_check_branch
          %145 = sbr.rel (%p143) target = $region16
        $region15: #{tpu_custom_call.1} parent=11 // pred_region
          _
        $region16: #{tpu_custom_call.1} parent=11 // pred_fallthru
          _
        // Predicated region
        $region17: #{tpu_custom_call.1} parent=11 // pred_check
          %p146 = pneg %p81
        $region18: #{tpu_custom_call.1} parent=11 // pred_check_branch
          %148 = sbr.rel (%p146) target = $region20
        $region19: #{tpu_custom_call.1} parent=11 // pred_region
          _
        $region20: #{tpu_custom_call.1} parent=11 // pred_fallthru
          _
        // Predicated region
        $region21: #{tpu_custom_call.1} parent=11 // pred_check
          %p149 = pneg %p102
        $region22: #{tpu_custom_call.1} parent=11 // pred_check_branch
          %151 = sbr.rel (%p149) target = $region24
        $region23: #{tpu_custom_call.1} parent=11 // pred_region
          _
        $region24: #{tpu_custom_call.1} parent=11 // pred_fallthru
          _
      $region12: #{tpu_custom_call.1} parent=5 // pred_fallthru
        _
      %p152 = scmp.lt.s32.totalorder %s13, 2
      // Predicated region
      $region25: #{tpu_custom_call.1} parent=5 // pred_check
        %p153 = pneg %p152
      $region26: #{tpu_custom_call.1} parent=5 // pred_check_branch
        %155 = sbr.rel (%p153) target = $region28
      $region27: #{tpu_custom_call.1} parent=5 // pred_region
        // Predicated region
        $region29: #{tpu_custom_call.1} parent=27 // pred_check
          %p156 = pneg %p33
        $region30: #{tpu_custom_call.1} parent=27 // pred_check_branch
          %158 = sbr.rel (%p156) target = $region32
        $region31: #{tpu_custom_call.1} parent=27 // pred_region
          %p159 = scmp.lt.s32.totalorder %s13, 1
          %s160 = scalar_select %p159, %s13, 1
          %s161 = smul.addr %s160, 8
          %s162 = scalar_lea.vmem %s0, %s161
        $region32: #{tpu_custom_call.1} parent=27 // pred_fallthru
          _
      $region28: #{tpu_custom_call.1} parent=5 // pred_fallthru
        _
      %p163 = scmp.le.s32.totalorder 1, %s13
      %p164 = scmp.lt.s32.totalorder %s13, 3
      %p165 = pnand %p163, %p164
      %p166 = pneg %p165
      // Predicated region
      $region33: #{tpu_custom_call.1} parent=5 // pred_check
        _
      $region34: #{tpu_custom_call.1} parent=5 // pred_check_branch
        %168 = sbr.rel (%p165) target = $region36
      $region35: #{tpu_custom_call.1} parent=5 // pred_region
        %s169 = ssub.s32 %s13, 1
        %p170 = scmp.lt.s32.totalorder %s18, 1
        %s171 = scalar_select %p170, %s18, 1
        %s172 = smul.addr %s171, 8
        %s173 = scalar_lea.vmem %s0, %s172
        %p174 = pneg %p39
        %p175 = pneg %p36
        %p176 = pneg %p60
        %p177 = pneg %p57
        %p178 = pneg %p81
        %p179 = pneg %p78
        %p180 = pneg %p102
        %p181 = pneg %p99
        %p182 = pneg %p128
        %p183 = pneg %p125
        %s184 = sand.u32 %s115, 1
        %s185 = scalar_lea.sflag [#allocation3], %s184
        %s186 = sand.u32 %s115, 1
        %s187 = smul.addr %s186, 8
        %s188 = scalar_lea.vmem [#allocation2], %s187
        %p189 = scmp.lt.s32.totalorder %s18, 1
        %s190 = scalar_select %p189, %s18, 1
        %s191 = smul.addr %s190, 8
        %s192 = scalar_lea.vmem %s0, %s191
        %v193 = vld [vmem:[%s192] sm:$0xff]
        %v194 = vld [vmem:[%s1] sm:$0xff]
        %v195 = vld [vmem:[%s1 + $0x8] sm:$0xff]
        %vm196 = vcmask 130048
        %v198 = vsel %vm196, %v193, 0
        %200 = vmatprep.subr.mxu0 0.0
        %201 = vmatpush1.msra.mxu0 0.0
        %202 = vmatprep.subr.mxu0 0.0
        %203 = vmatpush1.msra.mxu0 0.0
        %204 = vmatprep.subr.mxu0 0.0
        %205 = vmatpush1.msra.mxu0 0.0
        %206 = vmatprep.subr.mxu0 0.0
        %207 = vmatpush1.msra.mxu0 0.0
        %208 = vmatprep.subr.mxu0 0.0
        %209 = vmatpush1.msra.mxu0 0.0
        %210 = vmatprep.subr.mxu0 0.0
        %211 = vmatpush1.msra.mxu0 0.0
        %212 = vmatprep.subr.mxu0 0.0
        %213 = vmatpush1.msra.mxu0 0.0
        %214 = vmatprep.subr.mxu0 0.0
        %215 = vmatpush1.msra.mxu0 0.0
        %216 = vmatprep.subr.mxu0 0.0
        %217 = vmatpush1.msra.mxu0 0.0
        %218 = vmatprep.subr.mxu0 0.0
        %219 = vmatpush1.msra.mxu0 0.0
        %220 = vmatprep.subr.mxu0 0.0
        %221 = vmatpush1.msra.mxu0 0.0
        %222 = vmatprep.subr.mxu0 0.0
        %223 = vmatpush1.msra.mxu0 0.0
        %224 = vmatprep.subr.mxu0 0.0
        %225 = vmatpush1.msra.mxu0 0.0
        %226 = vmatprep.subr.mxu0 0.0
        %227 = vmatpush1.msra.mxu0 0.0
        %228 = vmatprep.subr.mxu0 0.0
        %229 = vmatpush1.msra.mxu0 %v195
        %230 = vmatprep.subr.mxu0 0.0
        %231 = vmatpush1.msra.mxu0 %v194
        %232 = vmatprep.subr.mxu0 0.0
        %233 = vmatpush2.msra.mxu0 0.0
        %234 = vmatprep.subr.mxu0 0.0
        %235 = vmatpush2.msra.mxu0 0.0
        %236 = vmatprep.subr.mxu0 0.0
        %237 = vmatpush2.msra.mxu0 0.0
        %238 = vmatprep.subr.mxu0 0.0
        %239 = vmatpush2.msra.mxu0 0.0
        %240 = vmatprep.subr.mxu0 0.0
        %241 = vmatpush2.msra.mxu0 0.0
        %242 = vmatprep.subr.mxu0 0.0
        %243 = vmatpush2.msra.mxu0 0.0
        %244 = vmatprep.subr.mxu0 0.0
        %245 = vmatpush2.msra.mxu0 0.0
        %246 = vmatprep.subr.mxu0 0.0
        %247 = vmatpush2.msra.mxu0 0.0
        %248 = vmatprep.subr.mxu0 0.0
        %249 = vmatpush2.msra.mxu0 0.0
        %250 = vmatprep.subr.mxu0 0.0
        %251 = vmatpush2.msra.mxu0 0.0
        %252 = vmatprep.subr.mxu0 0.0
        %253 = vmatpush2.msra.mxu0 0.0
        %254 = vmatprep.subr.mxu0 0.0
        %255 = vmatpush2.msra.mxu0 0.0
        %256 = vmatprep.subr.mxu0 0.0
        %257 = vmatpush2.msra.mxu0 0.0
        %258 = vmatprep.subr.mxu0 0.0
        %259 = vmatpush2.msra.mxu0 0.0
        %260 = vmatprep.subr.mxu0 0.0
        %261 = vmatpush2.msra.mxu0 0.0
        %262 = vmatprep.subr.mxu0 0.0
        %263 = vmatpush2.msra.mxu0 0.0
        %264 = vmatprep.mubr.f32.mxu0 0.0
        %265 = vmatmul.mubr.f32.gmra.mxu0 %v198
        %v266 = vpop.f32.mrf.mxu0
        %v267 = vadd.f32 0.0, %v266
        %v268 = vpop.f32.mrf.mxu0
        %269 = vdwg.mxu0
        %v270 = vld [vmem:[%s2] sm:$0xff]
        %v271 = vld [vmem:[%s2 + $0x8] sm:$0xff]
        %272 = vmatprep.subr.mxu0 0.0
        %273 = vmatpush1.msra.mxu0 0.0
        %274 = vmatprep.subr.mxu0 0.0
        %275 = vmatpush1.msra.mxu0 0.0
        %276 = vmatprep.subr.mxu0 0.0
        %277 = vmatpush1.msra.mxu0 0.0
        %278 = vmatprep.subr.mxu0 0.0
        %279 = vmatpush1.msra.mxu0 0.0
        %280 = vmatprep.subr.mxu0 0.0
        %281 = vmatpush1.msra.mxu0 0.0
        %282 = vmatprep.subr.mxu0 0.0
        %283 = vmatpush1.msra.mxu0 0.0
        %284 = vmatprep.subr.mxu0 0.0
        %285 = vmatpush1.msra.mxu0 0.0
        %286 = vmatprep.subr.mxu0 0.0
        %287 = vmatpush1.msra.mxu0 0.0
        %288 = vmatprep.subr.mxu0 0.0
        %289 = vmatpush1.msra.mxu0 0.0
        %290 = vmatprep.subr.mxu0 0.0
        %291 = vmatpush1.msra.mxu0 0.0
        %292 = vmatprep.subr.mxu0 0.0
        %293 = vmatpush1.msra.mxu0 0.0
        %294 = vmatprep.subr.mxu0 0.0
        %295 = vmatpush1.msra.mxu0 0.0
        %296 = vmatprep.subr.mxu0 0.0
        %297 = vmatpush1.msra.mxu0 0.0
        %298 = vmatprep.subr.mxu0 0.0
        %299 = vmatpush1.msra.mxu0 0.0
        %300 = vmatprep.subr.mxu0 0.0
        %301 = vmatpush1.msra.mxu0 %v271
        %302 = vmatprep.subr.mxu0 0.0
        %303 = vmatpush1.msra.mxu0 %v270
        %304 = vmatprep.subr.mxu0 0.0
        %305 = vmatpush2.msra.mxu0 0.0
        %306 = vmatprep.subr.mxu0 0.0
        %307 = vmatpush2.msra.mxu0 0.0
        %308 = vmatprep.subr.mxu0 0.0
        %309 = vmatpush2.msra.mxu0 0.0
        %310 = vmatprep.subr.mxu0 0.0
        %311 = vmatpush2.msra.mxu0 0.0
        %312 = vmatprep.subr.mxu0 0.0
        %313 = vmatpush2.msra.mxu0 0.0
        %314 = vmatprep.subr.mxu0 0.0
        %315 = vmatpush2.msra.mxu0 0.0
        %316 = vmatprep.subr.mxu0 0.0
        %317 = vmatpush2.msra.mxu0 0.0
        %318 = vmatprep.subr.mxu0 0.0
        %319 = vmatpush2.msra.mxu0 0.0
        %320 = vmatprep.subr.mxu0 0.0
        %321 = vmatpush2.msra.mxu0 0.0
        %322 = vmatprep.subr.mxu0 0.0
        %323 = vmatpush2.msra.mxu0 0.0
        %324 = vmatprep.subr.mxu0 0.0
        %325 = vmatpush2.msra.mxu0 0.0
        %326 = vmatprep.subr.mxu0 0.0
        %327 = vmatpush2.msra.mxu0 0.0
        %328 = vmatprep.subr.mxu0 0.0
        %329 = vmatpush2.msra.mxu0 0.0
        %330 = vmatprep.subr.mxu0 0.0
        %331 = vmatpush2.msra.mxu0 0.0
        %332 = vmatprep.subr.mxu0 0.0
        %333 = vmatpush2.msra.mxu0 0.0
        %334 = vmatprep.subr.mxu0 0.0
        %335 = vmatpush2.msra.mxu0 0.0
        %336 = vmatprep.mubr.f32.mxu0 0.0
        %337 = vmatmul.mubr.f32.gmra.mxu0 %v198
        %v338 = vpop.f32.mrf.mxu0
        %v339 = vadd.f32 0.0, %v338
        %v340 = vpop.f32.mrf.mxu0
        %341 = vdwg.mxu0
        %v342 = vmul.f32 %v339, %v267
        %v343 = vld [vmem:[%s3] sm:$0xff]
        %v344 = vld [vmem:[%s3 + $0x8] sm:$0xff]
        %v345 = vld [vmem:[%s3 + $0x10] sm:$0xff]
        %v346 = vld [vmem:[%s3 + $0x18] sm:$0xff]
        %vm347 = vcmask 261120
        %v349 = vsel %vm347, %v342, 0
        %351 = vmatprep.subr.mxu0 0.0
        %352 = vmatpush1.msra.mxu0 0.0
        %353 = vmatprep.subr.mxu0 0.0
        %354 = vmatpush1.msra.mxu0 0.0
        %355 = vmatprep.subr.mxu0 0.0
        %356 = vmatpush1.msra.mxu0 0.0
        %357 = vmatprep.subr.mxu0 0.0
        %358 = vmatpush1.msra.mxu0 0.0
        %359 = vmatprep.subr.mxu0 0.0
        %360 = vmatpush1.msra.mxu0 0.0
        %361 = vmatprep.subr.mxu0 0.0
        %362 = vmatpush1.msra.mxu0 0.0
        %363 = vmatprep.subr.mxu0 0.0
        %364 = vmatpush1.msra.mxu0 0.0
        %365 = vmatprep.subr.mxu0 0.0
        %366 = vmatpush1.msra.mxu0 0.0
        %367 = vmatprep.subr.mxu0 0.0
        %368 = vmatpush1.msra.mxu0 0.0
        %369 = vmatprep.subr.mxu0 0.0
        %370 = vmatpush1.msra.mxu0 0.0
        %371 = vmatprep.subr.mxu0 0.0
        %372 = vmatpush1.msra.mxu0 0.0
        %373 = vmatprep.subr.mxu0 0.0
        %374 = vmatpush1.msra.mxu0 0.0
        %375 = vmatprep.subr.mxu0 0.0
        %376 = vmatpush1.msra.mxu0 %v346
        %377 = vmatprep.subr.mxu0 0.0
        %378 = vmatpush1.msra.mxu0 %v345
        %379 = vmatprep.subr.mxu0 0.0
        %380 = vmatpush1.msra.mxu0 %v344
        %381 = vmatprep.subr.mxu0 0.0
        %382 = vmatpush1.msra.mxu0 %v343
        %383 = vmatprep.subr.mxu0 0.0
        %384 = vmatpush2.msra.mxu0 0.0
        %385 = vmatprep.subr.mxu0 0.0
        %386 = vmatpush2.msra.mxu0 0.0
        %387 = vmatprep.subr.mxu0 0.0
        %388 = vmatpush2.msra.mxu0 0.0
        %389 = vmatprep.subr.mxu0 0.0
        %390 = vmatpush2.msra.mxu0 0.0
        %391 = vmatprep.subr.mxu0 0.0
        %392 = vmatpush2.msra.mxu0 0.0
        %393 = vmatprep.subr.mxu0 0.0
        %394 = vmatpush2.msra.mxu0 0.0
        %395 = vmatprep.subr.mxu0 0.0
        %396 = vmatpush2.msra.mxu0 0.0
        %397 = vmatprep.subr.mxu0 0.0
        %398 = vmatpush2.msra.mxu0 0.0
        %399 = vmatprep.subr.mxu0 0.0
        %400 = vmatpush2.msra.mxu0 0.0
        %401 = vmatprep.subr.mxu0 0.0
        %402 = vmatpush2.msra.mxu0 0.0
        %403 = vmatprep.subr.mxu0 0.0
        %404 = vmatpush2.msra.mxu0 0.0
        %405 = vmatprep.subr.mxu0 0.0
        %406 = vmatpush2.msra.mxu0 0.0
        %407 = vmatprep.subr.mxu0 0.0
        %408 = vmatpush2.msra.mxu0 0.0
        %409 = vmatprep.subr.mxu0 0.0
        %410 = vmatpush2.msra.mxu0 0.0
        %411 = vmatprep.subr.mxu0 0.0
        %412 = vmatpush2.msra.mxu0 0.0
        %413 = vmatprep.subr.mxu0 0.0
        %414 = vmatpush2.msra.mxu0 0.0
        %415 = vmatprep.mubr.f32.mxu0 0.0
        %416 = vmatmul.mubr.f32.gmra.mxu0 %v349
        %v417 = vpop.f32.mrf.mxu0
        %v418 = vadd.f32 0.0, %v417
        %v419 = vpop.f32.mrf.mxu0
        %420 = vdwg.mxu0
        %421 = vst.msk [vmem:[%s188] sm:$0xff] %vm196, %v418
        %s422 = sand.u32 %s115, 1
        %s423 = scalar_lea.sflag [#allocation3], %s422
        %s424 = sand.u32 %s115, 1
        %s425 = smul.addr %s424, 8
        %s426 = scalar_lea.vmem [#allocation2], %s425
        // Predicated region
        $region37: #{tpu_custom_call.1} parent=35 // pred_check
          %p427 = pneg %p125
        $region38: #{tpu_custom_call.1} parent=35 // pred_check_branch
          %429 = sbr.rel (%p427) target = $region40
        $region39: #{tpu_custom_call.1} parent=35 // pred_region
          %s431 = ssub.s32 128, 128
          %432 = vsyncadd %s423, %s431
          %s433 = smul.addr %s18, 128
          %s434 = scalar_lea.hbm %s4, %s433
          %s436 = sshll.u32 %s426, 4
          %s437 = int_to_ptr.vmem [resolvable:$true] %s436
          %439 = dma.vmem_to_hbm [thread:$0]  %s437, 128, %s434, %s423
        $region40: #{tpu_custom_call.1} parent=35 // pred_fallthru
          _
      $region36: #{tpu_custom_call.1} parent=5 // pred_fallthru
        _
      %p440 = scmp.le.s32.totalorder 2, %s13
      // Predicated region
      $region41: #{tpu_custom_call.1} parent=5 // pred_check
        %p441 = pneg %p440
      $region42: #{tpu_custom_call.1} parent=5 // pred_check_branch
        %443 = sbr.rel (%p441) target = $region44
      $region43: #{tpu_custom_call.1} parent=5 // pred_region
        %s444 = ssub.s32 %s13, 2
        // Predicated region
        $region45: #{tpu_custom_call.1} parent=43 // pred_check
          %p445 = pneg %p131
        $region46: #{tpu_custom_call.1} parent=43 // pred_check_branch
          %447 = sbr.rel (%p445) target = $region48
        $region47: #{tpu_custom_call.1} parent=43 // pred_region
          %s448 = sand.u32 %s116, 1
          %s449 = scalar_lea.sflag [#allocation3], %s448
          %s450 = sand.u32 %s116, 1
          %s451 = smul.addr %s450, 8
          %s452 = scalar_lea.vmem [#allocation2], %s451
          %453 = dma.done %s449, 128
        $region48: #{tpu_custom_call.1} parent=43 // pred_fallthru
          _
      $region44: #{tpu_custom_call.1} parent=5 // pred_fallthru
        _
    $region6: #{tpu_custom_call.1} parent=1 // loop_footer
      %s17 = sadd.s32 1, %s13
    $region7: #{tpu_custom_call.1} parent=1 // loop_footer_branch
      %12 = sbr.rel target = $region3
    $region8: #{tpu_custom_call.1} parent=1 // loop_exit
      _
    %454 = vsyncpa [#allocation3], 1
    %s455 = scalar_lea.sflag [#allocation3], 1
    %456 = vsyncpa %s455, 1

</llo_original>
